<compile_context>
chip_gen: v7x
topology: tpu7x:2x2x1
jax: 0.10.0
libtpu: 0.0.40
codegen_flags: <defaults>
</compile_context>

<pallas_src>
import functools

import jax
import jax.numpy as jnp
from jax.experimental import pallas as pl
from jax.experimental.pallas import tpu as pltpu


def _laplacian_kernel(pos_ref, x_ref, o_ref, *, h, w):
    """pos_ref: (2, H*W) int32 [col; row] table.  x_ref/o_ref: (BC, H*W) blocks."""
    l = h * w
    x = x_ref[...]                          # (bc, h*w)
    col = pos_ref[0:1, :]                   # (1, h*w) int32: w-index of each flat pos
    row = pos_ref[1:2, :]                   # (1, h*w) int32: h-index of each flat pos

    # Horizontal neighbours: flat index i-1 / i+1 (rolls are periodic per row; the
    # wrapped values only appear at border columns, where the reflected neighbour
    # is selected instead).
    xm1 = pltpu.roll(x, 1, 1)               # value at flat index i-1
    xp1 = pltpu.roll(x, l - 1, 1)           # value at flat index i+1
    left = jnp.where(col == 0, xp1, xm1)          # reflect: col -1 -> col 1
    right = jnp.where(col == w - 1, xm1, xp1)     # reflect: col w  -> col w-2
    hsum = left + right

    # Vertical neighbours: flat index i-w / i+w.
    xmw = pltpu.roll(x, w, 1)               # value at flat index i-w (row above)
    xpw = pltpu.roll(x, l - w, 1)           # value at flat index i+w (row below)
    up = jnp.where(row == 0, xpw, xmw)            # reflect: row -1 -> row 1
    down = jnp.where(row == h - 1, xmw, xpw)      # reflect: row h  -> row h-2

    # kernel = [[0,1,0],[1,-4,1],[0,1,0]] / 4  ->  (sum of neighbours)/4 - center
    o_ref[...] = ((hsum + up + down) * 0.25 - x).astype(o_ref.dtype)


def _pick_block_rows(nc, row_bytes, target_bytes):
    """Largest divisor of nc whose (bc, H*W) block fits target_bytes; prefer bc % 8 == 0."""
    max_rows = max(1, target_bytes // max(row_bytes, 1))
    if nc <= max_rows:
        return nc
    best_any = 1
    for bc in range(min(nc, int(max_rows)), 0, -1):
        if nc % bc == 0:
            if bc % 8 == 0:
                return bc                      # sublane-aligned and largest such divisor
            if best_any == 1:
                best_any = bc                  # largest divisor, fallback
    return best_any


def laplacian_filter(x, *, block_bytes=1 << 20):
    """x: (N, C, H, W) float32 -> (N, C, H, W) float32 (matches the PyTorch module)."""
    N, C, H, W = x.shape
    nc = N * C
    L = H * W

    # Free, view-only layout change: one lane-dense row per (n, c) channel.
    xf = x.reshape(nc, L)

    # Tiny position table (col, row) for reflection boundary selects (computed once).
    flat = jnp.arange(L, dtype=jnp.int32)
    pos = jnp.stack([flat % W, flat // W], axis=0)    # (2, L) int32

    itemsize = x.dtype.itemsize
    bc = _pick_block_rows(nc, L * itemsize, block_bytes)
    grid = nc // bc

    out = pl.pallas_call(
        functools.partial(_laplacian_kernel, h=H, w=W),
        out_shape=jax.ShapeDtypeStruct((nc, L), x.dtype),
        grid_spec=pltpu.PrefetchScalarGridSpec(
            num_scalar_prefetch=0,
            grid=(grid,),
            in_specs=[
                pl.BlockSpec((2, L), lambda i: (0, 0)),      # position table (resident)
                pl.BlockSpec((bc, L), lambda i: (i, 0)),     # input channels, lane-dense
            ],
            out_specs=pl.BlockSpec((bc, L), lambda i: (i, 0)),
        ),
        compiler_params=pltpu.CompilerParams(
            dimension_semantics=("parallel",),
            vmem_limit_bytes=32 * 1024 * 1024,               # safe on v5e/v6e/v7x
        ),
        cost_estimate=pl.CostEstimate(
            flops=6 * nc * L,
            transcendentals=0,
            bytes_accessed=2 * nc * L * itemsize + 2 * L * 4,
        ),
    )(pos, xf)
    return out.reshape(N, C, H, W)


def _reference(x):
    """Pure-JAX reference: ReflectionPad2d(1) + fixed /4 Laplacian conv (depthwise)."""
    xp = jnp.pad(x, ((0, 0), (0, 0), (1, 1), (1, 1)), mode="reflect")
    H, W = x.shape[2], x.shape[3]
    center = xp[:, :, 1:H + 1, 1:W + 1]
    up     = xp[:, :, 0:H,     1:W + 1]
    down   = xp[:, :, 2:H + 2, 1:W + 1]
    left   = xp[:, :, 1:H + 1, 0:W]
    right  = xp[:, :, 1:H + 1, 2:W + 2]
    return (up + down + left + right - 4.0 * center) * 0.25


if __name__ == "__main__":
    key = jax.random.PRNGKey(0)
    x = jax.random.normal(key, (2, 4, 16, 16), dtype=jnp.float32)

    out = jax.block_until_ready(laplacian_filter(x))

    ref = _reference(x)
    assert out.shape == x.shape and out.dtype == x.dtype
    assert jnp.allclose(out, ref, atol=1e-5, rtol=1e-5)

    print("KERNEL_OK")
</pallas_src>

<mosaic_0001>
module attributes {stable_mosaic.version = 11 : i64} {
  func.func @_laplacian_kernel(%arg0: i32, %arg1: memref<2x256xi32, #tpu.memory_space<vmem>>, %arg2: memref<8x256xf32, #tpu.memory_space<vmem>>, %arg3: memref<8x256xf32, #tpu.memory_space<vmem>>) attributes {dimension_semantics = [#tpu.dimension_semantics<parallel>], iteration_bounds = array<i64: 1>, scalar_prefetch = 0 : i64, scratch_operands = 0 : i64, tpu.core_type = #tpu.core_type<tc>, window_params = [{pipeline_mode = #tpu.pipeline_mode<synchronous>, transform_indices = @transform_0, window_bounds = array<i64: 2, 256>}, {transform_indices = @transform_1, window_bounds = array<i64: 8, 256>}, {transform_indices = @transform_2, window_bounds = array<i64: 8, 256>}]} {
    %c0 = arith.constant 0 : index
    %c0_0 = arith.constant 0 : index
    %0 = vector.load %arg2[%c0, %c0_0] : memref<8x256xf32, #tpu.memory_space<vmem>>, vector<8x256xf32>
    %c0_1 = arith.constant 0 : index
    %c0_2 = arith.constant 0 : index
    %1 = vector.load %arg1[%c0_1, %c0_2] : memref<2x256xi32, #tpu.memory_space<vmem>>, vector<1x256xi32>
    %c1 = arith.constant 1 : index
    %c0_3 = arith.constant 0 : index
    %2 = vector.load %arg1[%c1, %c0_3] : memref<2x256xi32, #tpu.memory_space<vmem>>, vector<1x256xi32>
    %c1_i32 = arith.constant 1 : i32
    %3 = tpu.dynamic_rotate %0 by %c1_i32 dim 1 : vector<8x256xf32>, i32 -> vector<8x256xf32>
    %c255_i32 = arith.constant 255 : i32
    %4 = tpu.dynamic_rotate %0 by %c255_i32 dim 1 : vector<8x256xf32>, i32 -> vector<8x256xf32>
    %c0_i32 = arith.constant 0 : i32
    %5 = vector.broadcast %c0_i32 : i32 to vector<1x256xi32>
    %6 = arith.cmpi eq, %1, %5 : vector<1x256xi32>
    %7 = vector.shape_cast %6 : vector<1x256xi1> to vector<1x256xi1>
    %8 = vector.broadcast %7 : vector<1x256xi1> to vector<8x256xi1>
    %9 = arith.select %8, %4, %3 : vector<8x256xi1>, vector<8x256xf32>
    %c15_i32 = arith.constant 15 : i32
    %10 = vector.broadcast %c15_i32 : i32 to vector<1x256xi32>
    %11 = arith.cmpi eq, %1, %10 : vector<1x256xi32>
    %12 = vector.shape_cast %11 : vector<1x256xi1> to vector<1x256xi1>
    %13 = vector.broadcast %12 : vector<1x256xi1> to vector<8x256xi1>
    %14 = arith.select %13, %3, %4 : vector<8x256xi1>, vector<8x256xf32>
    %15 = arith.addf %9, %14 : vector<8x256xf32>
    %c16_i32 = arith.constant 16 : i32
    %16 = tpu.dynamic_rotate %0 by %c16_i32 dim 1 : vector<8x256xf32>, i32 -> vector<8x256xf32>
    %c240_i32 = arith.constant 240 : i32
    %17 = tpu.dynamic_rotate %0 by %c240_i32 dim 1 : vector<8x256xf32>, i32 -> vector<8x256xf32>
    %c0_i32_4 = arith.constant 0 : i32
    %18 = vector.broadcast %c0_i32_4 : i32 to vector<1x256xi32>
    %19 = arith.cmpi eq, %2, %18 : vector<1x256xi32>
    %20 = vector.shape_cast %19 : vector<1x256xi1> to vector<1x256xi1>
    %21 = vector.broadcast %20 : vector<1x256xi1> to vector<8x256xi1>
    %22 = arith.select %21, %17, %16 : vector<8x256xi1>, vector<8x256xf32>
    %c15_i32_5 = arith.constant 15 : i32
    %23 = vector.broadcast %c15_i32_5 : i32 to vector<1x256xi32>
    %24 = arith.cmpi eq, %2, %23 : vector<1x256xi32>
    %25 = vector.shape_cast %24 : vector<1x256xi1> to vector<1x256xi1>
    %26 = vector.broadcast %25 : vector<1x256xi1> to vector<8x256xi1>
    %27 = arith.select %26, %16, %17 : vector<8x256xi1>, vector<8x256xf32>
    %28 = arith.addf %15, %22 : vector<8x256xf32>
    %29 = arith.addf %28, %27 : vector<8x256xf32>
    %cst = arith.constant 2.500000e-01 : f32
    %30 = vector.broadcast %cst : f32 to vector<8x256xf32>
    %31 = arith.mulf %29, %30 : vector<8x256xf32>
    %32 = arith.subf %31, %0 : vector<8x256xf32>
    %c0_6 = arith.constant 0 : index
    %c0_7 = arith.constant 0 : index
    %33 = vector.load %arg3[%c0_6, %c0_7] : memref<8x256xf32, #tpu.memory_space<vmem>>, vector<8x256xf32>
    tpu.vector_store %arg3[%c0_6, %c0_7], %32 {strides = array<i32>} : memref<8x256xf32, #tpu.memory_space<vmem>>, vector<8x256xf32>,
    return
  }
  func.func @transform_0(%arg0: i32) -> (i32, i32) {
    %c0_i32 = arith.constant 0 : i32
    %c0_i32_0 = arith.constant 0 : i32
    %c0_i32_1 = arith.constant 0 : i32
    return %c0_i32, %c0_i32_0 : i32, i32
  }
  func.func @transform_1(%arg0: i32) -> (i32, i32) {
    %c0_i32 = arith.constant 0 : i32
    %c0_i32_0 = arith.constant 0 : i32
    return %arg0, %c0_i32 : i32, i32
  }
  func.func @transform_2(%arg0: i32) -> (i32, i32) {
    %c0_i32 = arith.constant 0 : i32
    %c0_i32_0 = arith.constant 0 : i32
    return %arg0, %c0_i32 : i32, i32
  }
}

</mosaic_0001>

<llo_original>
// kernel: tpu_custom_call.1
$region0: #{tpu_custom_call.1}
  #allocation0 [shape = 'u32[]', space=smem, size = 0x4, offset = 0x4, fixed_abs, tag = 'smem constant byte address 0x4 - core index']
  #allocation1 [shape = 'u32[144,128]{1,0:T(1,128)}', space=vmem, size = 0x12000, scoped, tag = 'internal scratch']
  %s0 = inlined_call_operand.hbm [shape: s32[2,256], index: 0, kind: input, shape index: {}]
  %s1 = inlined_call_operand.hbm [shape: f32[8,256], index: 1, kind: input, shape index: {}]
  %s2 = inlined_call_operand.hbm [shape: f32[8,256], index: 2, kind: output, shape index: {}]
  %s3 = sld [smem:[#allocation0]]
  $region26: #{tpu_custom_call.1} parent=0
    _
  %s5 = ssub.s32 1, %s3
  %s6 = scalar_select 0, %s5, %s3
  $region1: #{tpu_custom_call.1} parent=0
    #allocation2 [shape = 'u8[2048]{0}', space=vmem, size = 0x800, scoped, tag = 'input window, operand 0, single buffered']
    #allocation3 [shape = 's32[1]{0}', space=sflag, size = 0x4, scoped, tag = 'scoped memory for tpu_custom_call.1']
    #allocation4 [shape = 's32[1]{0}', space=sflag, size = 0x4, scoped, tag = 'scoped memory for tpu_custom_call.1']
    #allocation5 [shape = 'u8[8192]{0}', space=vmem, size = 0x2000, scoped, tag = 'input window, operand 1, single buffered']
    #allocation6 [shape = 's32[1]{0}', space=sflag, size = 0x4, scoped, tag = 'scoped memory for tpu_custom_call.1']
    #allocation7 [shape = 'u8[8192]{0}', space=vmem, size = 0x2000, scoped, tag = 'output window, operand 0, single buffered']
    %7 = vsyncpa [#allocation3], 0
    %8 = vsyncpa [#allocation6], 0
    %9 = vsyncpa [#allocation4], 0
    // Predicated region
    $region2: #{tpu_custom_call.1} parent=1 // pred_check
      _
    $region3: #{tpu_custom_call.1} parent=1 // pred_check_branch
      %11 = sbr.rel (0) target = $region5
    $region4: #{tpu_custom_call.1} parent=1 // pred_region
      %s13 = ssub.s32 64, 64
      %14 = vsyncadd [#allocation3], %s13
      %s16 = sshll.u32 [#allocation2], 4
      %s17 = int_to_ptr.vmem [resolvable:$true] %s16
      %19 = dma.hbm_to_vmem [thread:$0]  %s0, 64, %s17, [#allocation3]
    $region5: #{tpu_custom_call.1} parent=1 // pred_fallthru
      _
    // Predicated region
    $region6: #{tpu_custom_call.1} parent=1 // pred_check
      _
    $region7: #{tpu_custom_call.1} parent=1 // pred_check_branch
      %21 = sbr.rel (0) target = $region9
    $region8: #{tpu_custom_call.1} parent=1 // pred_region
      %s23 = ssub.s32 256, 256
      %24 = vsyncadd [#allocation6], %s23
      %s26 = sshll.u32 [#allocation5], 4
      %s27 = int_to_ptr.vmem [resolvable:$true] %s26
      %29 = dma.hbm_to_vmem [thread:$0]  %s1, 256, %s27, [#allocation6]
    $region9: #{tpu_custom_call.1} parent=1 // pred_fallthru
      _
    // Predicated region
    $region10: #{tpu_custom_call.1} parent=1 // pred_check
      _
    $region11: #{tpu_custom_call.1} parent=1 // pred_check_branch
      %31 = sbr.rel (0) target = $region13
    $region12: #{tpu_custom_call.1} parent=1 // pred_region
      %32 = dma.done [#allocation3], 64
    $region13: #{tpu_custom_call.1} parent=1 // pred_fallthru
      _
    // Predicated region
    $region14: #{tpu_custom_call.1} parent=1 // pred_check
      _
    $region15: #{tpu_custom_call.1} parent=1 // pred_check_branch
      %34 = sbr.rel (0) target = $region17
    $region16: #{tpu_custom_call.1} parent=1 // pred_region
      %35 = dma.done [#allocation6], 256
    $region17: #{tpu_custom_call.1} parent=1 // pred_fallthru
      _
    %v36 = vld [vmem:[#allocation5] sm:$0xff]
    %v37 = vld [vmem:[#allocation5 + $0x8] sm:$0xff]
    %v38 = vld [vmem:[#allocation2] ss:$2 sm:$0x3]
    %s39 = scalar_lea.vmem [#allocation2], 1
    %v40 = vld [vmem:[%s39] ss:$2 sm:$0x3]
    %41 = vrot.lane.b32.xlu0 %v36, 1
    %v42 = vpop.permute.xlu0 %41
    %43 = vrot.lane.b32.xlu0 %v37, 1
    %v44 = vpop.permute.xlu0 %43
    %v45 = vlaneseq
    %v46 = vand.u32 %v45, 127
    %vm47 = vcmp.lt.s32.totalorder %v46, 1
    %v48 = vsel %vm47, %v42, %v44
    %v49 = vsel %vm47, %v44, %v42
    %50 = vrot.lane.b32.xlu0 %v36, 127
    %v51 = vpop.permute.xlu0 %50
    %52 = vrot.lane.b32.xlu0 %v37, 127
    %v53 = vpop.permute.xlu0 %52
    %vm54 = vcmp.lt.s32.totalorder %v46, 127
    %v55 = vsel %vm54, %v51, %v53
    %v56 = vsel %vm54, %v53, %v51
    %vm57 = vcmp.eq.s32.totalorder %v38, 0
    %v58 = vsel %vm57, 1, 0
    %v59 = vlaneseq
    %v60 = vshrl.u32 %v59, 7
    %v61 = vsub.s32 0, %v60
    %v62 = vrot.slane %v58, %v61
    %v63 = vlaneseq
    %v64 = vshrl.u32 %v63, 7
    %v65 = vsub.s32 1, %v64
    %v66 = vrot.slane %v58, %v65
    %vm67 = vcmp.eq.s32.totalorder %v62, 1
    %vm68 = vcmp.eq.s32.totalorder %v66, 1
    %v69 = vsel %vm67, %v55, %v49
    %v70 = vsel %vm68, %v56, %v48
    %vm71 = vcmp.eq.s32.totalorder %v38, 15
    %v72 = vsel %vm71, 1, 0
    %v73 = vlaneseq
    %v74 = vshrl.u32 %v73, 7
    %v75 = vsub.s32 0, %v74
    %v76 = vrot.slane %v72, %v75
    %v77 = vlaneseq
    %v78 = vshrl.u32 %v77, 7
    %v79 = vsub.s32 1, %v78
    %v80 = vrot.slane %v72, %v79
    %vm81 = vcmp.eq.s32.totalorder %v76, 1
    %vm82 = vcmp.eq.s32.totalorder %v80, 1
    %v83 = vsel %vm81, %v49, %v55
    %v84 = vsel %vm82, %v48, %v56
    %v85 = vadd.f32 %v69, %v83
    %v86 = vadd.f32 %v70, %v84
    %87 = vrot.lane.b32.xlu0 %v36, 16
    %v88 = vpop.permute.xlu0 %87
    %89 = vrot.lane.b32.xlu0 %v37, 16
    %v90 = vpop.permute.xlu0 %89
    %vm91 = vcmp.lt.s32.totalorder %v46, 16
    %v92 = vsel %vm91, %v88, %v90
    %v93 = vsel %vm91, %v90, %v88
    %94 = vrot.lane.b32.xlu0 %v36, 112
    %v95 = vpop.permute.xlu0 %94
    %96 = vrot.lane.b32.xlu0 %v37, 112
    %v97 = vpop.permute.xlu0 %96
    %vm98 = vcmp.lt.s32.totalorder %v46, 112
    %v99 = vsel %vm98, %v95, %v97
    %v100 = vsel %vm98, %v97, %v95
    %vm101 = vcmp.eq.s32.totalorder %v40, 0
    %v102 = vsel %vm101, 1, 0
    %v103 = vlaneseq
    %v104 = vshrl.u32 %v103, 7
    %v105 = vsub.s32 0, %v104
    %v106 = vrot.slane %v102, %v105
    %v107 = vlaneseq
    %v108 = vshrl.u32 %v107, 7
    %v109 = vsub.s32 1, %v108
    %v110 = vrot.slane %v102, %v109
    %vm111 = vcmp.eq.s32.totalorder %v106, 1
    %vm112 = vcmp.eq.s32.totalorder %v110, 1
    %v113 = vsel %vm111, %v99, %v93
    %v114 = vsel %vm112, %v100, %v92
    %vm115 = vcmp.eq.s32.totalorder %v40, 15
    %v116 = vsel %vm115, 1, 0
    %v117 = vlaneseq
    %v118 = vshrl.u32 %v117, 7
    %v119 = vsub.s32 0, %v118
    %v120 = vrot.slane %v116, %v119
    %v121 = vlaneseq
    %v122 = vshrl.u32 %v121, 7
    %v123 = vsub.s32 1, %v122
    %v124 = vrot.slane %v116, %v123
    %vm125 = vcmp.eq.s32.totalorder %v120, 1
    %vm126 = vcmp.eq.s32.totalorder %v124, 1
    %v127 = vsel %vm125, %v93, %v99
    %v128 = vsel %vm126, %v92, %v100
    %v129 = vadd.f32 %v85, %v113
    %v130 = vadd.f32 %v86, %v114
    %v131 = vadd.f32 %v129, %v127
    %v132 = vadd.f32 %v130, %v128
    %v133 = vmul.f32 %v131, 0.25
    %v134 = vmul.f32 %v132, 0.25
    %v135 = vsub.f32 %v133, %v36
    %v136 = vsub.f32 %v134, %v37
    %137 = vst [vmem:[#allocation7] sm:$0xff] %v135
    %138 = vst [vmem:[#allocation7 + $0x8] sm:$0xff] %v136
    // Predicated region
    $region18: #{tpu_custom_call.1} parent=1 // pred_check
      _
    $region19: #{tpu_custom_call.1} parent=1 // pred_check_branch
      %140 = sbr.rel (0) target = $region21
    $region20: #{tpu_custom_call.1} parent=1 // pred_region
      %s142 = ssub.s32 256, 256
      %143 = vsyncadd [#allocation4], %s142
      %s145 = sshll.u32 [#allocation7], 4
      %s146 = int_to_ptr.vmem [resolvable:$true] %s145
      %148 = dma.vmem_to_hbm [thread:$0]  %s146, 256, %s2, [#allocation4]
    $region21: #{tpu_custom_call.1} parent=1 // pred_fallthru
      _
    // Predicated region
    $region22: #{tpu_custom_call.1} parent=1 // pred_check
      _
    $region23: #{tpu_custom_call.1} parent=1 // pred_check_branch
      %150 = sbr.rel (0) target = $region25
    $region24: #{tpu_custom_call.1} parent=1 // pred_region
      %151 = dma.done [#allocation4], 256
    $region25: #{tpu_custom_call.1} parent=1 // pred_fallthru
      _
    %152 = vsyncpa [#allocation3], 1
    %153 = vsyncpa [#allocation6], 1
    %154 = vsyncpa [#allocation4], 1

</llo_original>
